<compile_context>
chip_gen: v7x
topology: tpu7x:2x2x1
jax: 0.10.0
libtpu: 0.0.40
codegen_flags: <defaults>
</compile_context>

<pallas_src>
import functools

import jax
import jax.numpy as jnp
from jax import lax
from jax.experimental import pallas as pl
from jax.experimental.pallas import tpu as pltpu


def _round_up(v, m):
    return (v + m - 1) // m * m


# --------------------------------------------------------------------------
# Pass 1: attention = softmax(rowmax(E) - E),  E = X @ X^T accumulated over N
# --------------------------------------------------------------------------
def _energy_softmax_kernel(x_ref, attn_ref, *, matmul_dtype):
    n = pl.program_id(1)

    @pl.when(n == 0)
    def _init():
        attn_ref[...] = jnp.zeros_like(attn_ref)

    xt = x_ref[...]                                   # (C, tile_n), storage dtype
    mm_dtype = matmul_dtype if matmul_dtype is not None else xt.dtype
    xt = xt.astype(mm_dtype)

    # energy += X_tile @ X_tile^T  (contract the spatial axis of both operands)
    attn_ref[...] += lax.dot_general(
        xt, xt,
        dimension_numbers=(((1,), (1,)), ((), ())),
        preferred_element_type=jnp.float32,
    )

    @pl.when(n == pl.num_programs(1) - 1)
    def _finalize():
        energy = attn_ref[...]                        # (C, C) f32
        # softmax(rowmax(E) - E) is shift-invariant per row; the numerically
        # stable form collapses to exp(rowmin(E) - E) -> single row reduction.
        m = jnp.min(energy, axis=-1, keepdims=True)
        e = jnp.exp(m - energy)
        denom = jnp.sum(e, axis=-1, keepdims=True)
        attn_ref[...] = e * pl.reciprocal(denom, approx=True)


# --------------------------------------------------------------------------
# Pass 2: out_tile = gamma * (attn @ x_tile) + x_tile
# --------------------------------------------------------------------------
def _apply_kernel(gamma_ref, attn_ref, x_ref, o_ref, *, matmul_dtype):
    x_t = x_ref[...]                                  # (C, tile_n), storage dtype
    mm_dtype = matmul_dtype if matmul_dtype is not None else x_t.dtype

    out = jnp.dot(
        attn_ref[...].astype(mm_dtype),
        x_t.astype(mm_dtype),
        preferred_element_type=jnp.float32,
    )                                                 # (C, tile_n) f32

    gamma = gamma_ref[0]
    o_ref[...] = (gamma * out + x_t.astype(jnp.float32)).astype(o_ref.dtype)


# --------------------------------------------------------------------------
# Wrapper
# --------------------------------------------------------------------------
def cam_module(x, gamma, *, tn=512, matmul_dtype=None):
    """x: (B, C, H, W) (NCHW, same as PyTorch); gamma: (1,) float32.

    matmul_dtype=None keeps matmul operands in x.dtype (exact semantics for
    f32 inputs); matmul_dtype=jnp.bfloat16 enables the bf16 MXU fast path
    (f32 accumulation) with a small accuracy delta.
    """
    B, C, H, W = x.shape
    N = H * W
    x_flat = x.reshape(B, C, N)

    # Lane-dense spatial tile: multiple of 128, `tn`-wide when N is large.
    tile_n = _round_up(N, 128) if N <= tn else tn
    n_pad = _round_up(N, tile_n)
    if n_pad != N:
        x_flat = jnp.pad(x_flat, ((0, 0), (0, 0), (0, n_pad - N)))
    n_tiles = n_pad // tile_n

    itemsize = jnp.dtype(x.dtype).itemsize

    # ---- Pass 1: per-batch channel attention (B, C, C) ----
    attn = pl.pallas_call(
        functools.partial(_energy_softmax_kernel, matmul_dtype=matmul_dtype),
        out_shape=jax.ShapeDtypeStruct((B, C, C), jnp.float32),
        grid_spec=pltpu.PrefetchScalarGridSpec(
            num_scalar_prefetch=0,
            grid=(B, n_tiles),
            in_specs=[
                pl.BlockSpec((pl.Squeezed(), C, tile_n), lambda b, n: (b, 0, n)),
            ],
            out_specs=pl.BlockSpec((pl.Squeezed(), C, C), lambda b, n: (b, 0, 0)),
        ),
        compiler_params=pltpu.CompilerParams(
            dimension_semantics=("parallel", "arbitrary"),
        ),
        cost_estimate=pl.CostEstimate(
            flops=2 * B * C * C * n_pad,
            transcendentals=B * C * C,
            bytes_accessed=B * C * n_pad * itemsize + B * C * C * 4,
        ),
    )(x_flat)

    # ---- Pass 2: out = gamma * (attn @ X) + X ----
    out_flat = pl.pallas_call(
        functools.partial(_apply_kernel, matmul_dtype=matmul_dtype),
        out_shape=jax.ShapeDtypeStruct((B, C, n_pad), x.dtype),
        grid_spec=pltpu.PrefetchScalarGridSpec(
            num_scalar_prefetch=0,
            grid=(B, n_tiles),
            in_specs=[
                pl.BlockSpec(memory_space=pltpu.MemorySpace.SMEM),            # gamma
                pl.BlockSpec((pl.Squeezed(), C, C), lambda b, n: (b, 0, 0)),  # attn
                pl.BlockSpec((pl.Squeezed(), C, tile_n), lambda b, n: (b, 0, n)),
            ],
            out_specs=pl.BlockSpec((pl.Squeezed(), C, tile_n), lambda b, n: (b, 0, n)),
        ),
        compiler_params=pltpu.CompilerParams(
            dimension_semantics=("parallel", "parallel"),
        ),
        cost_estimate=pl.CostEstimate(
            flops=2 * B * C * C * n_pad,
            transcendentals=0,
            bytes_accessed=2 * B * C * n_pad * itemsize + B * C * C * 4,
        ),
    )(gamma, attn, x_flat)

    if n_pad != N:
        out_flat = out_flat[:, :, :N]
    return out_flat.reshape(B, C, H, W)


def cam_reference(x, gamma):
    """Pure-JAX reference matching the PyTorch forward exactly."""
    B, C, H, W = x.shape
    q = x.reshape(B, C, -1)
    energy = jnp.einsum("bcn,bdn->bcd", q, q)
    energy_new = jnp.max(energy, axis=-1, keepdims=True) - energy
    attn = jax.nn.softmax(energy_new, axis=-1)
    out = jnp.einsum("bcd,bdn->bcn", attn, q).reshape(B, C, H, W)
    return gamma[0] * out + x


if __name__ == "__main__":
    key = jax.random.PRNGKey(0)
    B, C, H, W = 2, 4, 16, 16
    x = jax.random.normal(key, (B, C, H, W), dtype=jnp.float32)

    # gamma as initialized in the module (zeros) -> output equals input.
    gamma0 = jnp.zeros((1,), dtype=jnp.float32)
    out0 = jax.block_until_ready(cam_module(x, gamma0))
    assert out0.shape == (B, C, H, W)
    assert jnp.allclose(out0, cam_reference(x, gamma0), atol=1e-5, rtol=1e-5)

    # Non-zero gamma exercises the full attention path (f32 matmuls, approx
    # reciprocal in the softmax denominator).
    gamma1 = jnp.asarray([0.7], dtype=jnp.float32)
    out1 = jax.block_until_ready(cam_module(x, gamma1))
    ref1 = cam_reference(x, gamma1)
    assert jnp.allclose(out1, ref1, atol=1e-2, rtol=1e-2), "mismatch vs reference"

    # bf16 MXU fast path (perf-review recommendation): verify it compiles and
    # produces finite output; numerics intentionally differ slightly from f32.
    out_bf16 = jax.block_until_ready(
        cam_module(x, gamma1, matmul_dtype=jnp.bfloat16))
    assert out_bf16.shape == (B, C, H, W)
    assert bool(jnp.isfinite(out_bf16).all())

    print("KERNEL_OK")
</pallas_src>

<mosaic_0001>
module attributes {stable_mosaic.version = 11 : i64} {
  func.func @_energy_softmax_kernel(%arg0: i32, %arg1: i32, %arg2: memref<1x4x256xf32, #tpu.memory_space<vmem>>, %arg3: memref<1x4x4xf32, #tpu.memory_space<vmem>>) attributes {dimension_semantics = [#tpu.dimension_semantics<parallel>, #tpu.dimension_semantics<arbitrary>], iteration_bounds = array<i64: 2, 1>, scalar_prefetch = 0 : i64, scratch_operands = 0 : i64, tpu.core_type = #tpu.core_type<tc>, window_params = [{transform_indices = @transform_0, window_bounds = array<i64: 1, 4, 256>}, {transform_indices = @transform_1, window_bounds = array<i64: 1, 4, 4>}]} {
    %c0_i32 = arith.constant 0 : i32
    %0 = arith.cmpi eq, %arg1, %c0_i32 : i32
    %1 = arith.extui %0 : i1 to i32
    %c0_i32_0 = arith.constant 0 : i32
    %2 = arith.cmpi ne, %1, %c0_i32_0 : i32
    scf.if %2 {
      %cst_11 = arith.constant 0.000000e+00 : f32
      %15 = vector.broadcast %cst_11 : f32 to vector<4x4xf32>
      %c0_12 = arith.constant 0 : index
      %c0_13 = arith.constant 0 : index
      %c0_14 = arith.constant 0 : index
      %16 = vector.load %arg3[%c0_12, %c0_13, %c0_14] : memref<1x4x4xf32, #tpu.memory_space<vmem>>, vector<1x4x4xf32>
      %17 = vector.shape_cast %16 : vector<1x4x4xf32> to vector<4x4xf32>
      %18 = vector.shape_cast %15 : vector<4x4xf32> to vector<1x4x4xf32>
      tpu.vector_store %arg3[%c0_12, %c0_13, %c0_14], %18 {strides = array<i32>} : memref<1x4x4xf32, #tpu.memory_space<vmem>>, vector<1x4x4xf32>,
    } else {
    }
    %c0 = arith.constant 0 : index
    %c0_1 = arith.constant 0 : index
    %c0_2 = arith.constant 0 : index
    %3 = vector.load %arg2[%c0, %c0_1, %c0_2] : memref<1x4x256xf32, #tpu.memory_space<vmem>>, vector<1x4x256xf32>
    %4 = vector.shape_cast %3 : vector<1x4x256xf32> to vector<4x256xf32>
    %c0_3 = arith.constant 0 : index
    %c0_4 = arith.constant 0 : index
    %c0_5 = arith.constant 0 : index
    %5 = vector.load %arg3[%c0_3, %c0_4, %c0_5] : memref<1x4x4xf32, #tpu.memory_space<vmem>>, vector<1x4x4xf32>
    %6 = vector.shape_cast %5 : vector<1x4x4xf32> to vector<4x4xf32>
    %cst = arith.constant dense<0.000000e+00> : vector<4x4xf32>
    %7 = tpu.matmul %4, %4, %cst {dimension_numbers = #tpu.dot_dimension_numbers<[1], [1], [0], [0], [0, 0, 1, 0], [], []>} : vector<4x256xf32>, vector<4x256xf32>, vector<4x4xf32> -> vector<4x4xf32>
    %8 = arith.addf %6, %7 : vector<4x4xf32>
    %c0_6 = arith.constant 0 : index
    %c0_7 = arith.constant 0 : index
    %c0_8 = arith.constant 0 : index
    %9 = vector.load %arg3[%c0_6, %c0_7, %c0_8] : memref<1x4x4xf32, #tpu.memory_space<vmem>>, vector<1x4x4xf32>
    %10 = vector.shape_cast %9 : vector<1x4x4xf32> to vector<4x4xf32>
    %11 = vector.shape_cast %8 : vector<4x4xf32> to vector<1x4x4xf32>
    tpu.vector_store %arg3[%c0_6, %c0_7, %c0_8], %11 {strides = array<i32>} : memref<1x4x4xf32, #tpu.memory_space<vmem>>, vector<1x4x4xf32>,
    %c0_i32_9 = arith.constant 0 : i32
    %12 = arith.cmpi eq, %arg1, %c0_i32_9 : i32
    %13 = arith.extui %12 : i1 to i32
    %c0_i32_10 = arith.constant 0 : i32
    %14 = arith.cmpi ne, %13, %c0_i32_10 : i32
    scf.if %14 {
      %c0_11 = arith.constant 0 : index
      %c0_12 = arith.constant 0 : index
      %c0_13 = arith.constant 0 : index
      %15 = vector.load %arg3[%c0_11, %c0_12, %c0_13] : memref<1x4x4xf32, #tpu.memory_space<vmem>>, vector<1x4x4xf32>
      %16 = vector.shape_cast %15 : vector<1x4x4xf32> to vector<4x4xf32>
      %cst_14 = arith.constant dense<0x7F800000> : vector<4xf32>
      %17 = vector.multi_reduction <minimumf>, %16, %cst_14 [1] : vector<4x4xf32> to vector<4xf32>
      %18 = vector.shape_cast %17 : vector<4xf32> to vector<4x1xf32>
      %19 = vector.broadcast %18 : vector<4x1xf32> to vector<4x4xf32>
      %20 = arith.subf %19, %16 : vector<4x4xf32>
      %21 = math.exp %20 : vector<4x4xf32>
      %cst_15 = arith.constant dense<0.000000e+00> : vector<4xf32>
      %22 = vector.multi_reduction <add>, %21, %cst_15 [1] : vector<4x4xf32> to vector<4xf32>
      %23 = vector.shape_cast %22 : vector<4xf32> to vector<4x1xf32>
      %24 = tpu.reciprocal %23 {approx = true} : vector<4x1xf32> -> vector<4x1xf32>
      %25 = vector.broadcast %24 : vector<4x1xf32> to vector<4x4xf32>
      %26 = arith.mulf %21, %25 : vector<4x4xf32>
      %c0_16 = arith.constant 0 : index
      %c0_17 = arith.constant 0 : index
      %c0_18 = arith.constant 0 : index
      %27 = vector.load %arg3[%c0_16, %c0_17, %c0_18] : memref<1x4x4xf32, #tpu.memory_space<vmem>>, vector<1x4x4xf32>
      %28 = vector.shape_cast %27 : vector<1x4x4xf32> to vector<4x4xf32>
      %29 = vector.shape_cast %26 : vector<4x4xf32> to vector<1x4x4xf32>
      tpu.vector_store %arg3[%c0_16, %c0_17, %c0_18], %29 {strides = array<i32>} : memref<1x4x4xf32, #tpu.memory_space<vmem>>, vector<1x4x4xf32>,
    } else {
    }
    return
  }
  func.func @transform_0(%arg0: i32, %arg1: i32) -> (i32, i32, i32) {
    %c0_i32 = arith.constant 0 : i32
    %c0_i32_0 = arith.constant 0 : i32
    return %arg0, %c0_i32, %arg1 : i32, i32, i32
  }
  func.func @transform_1(%arg0: i32, %arg1: i32) -> (i32, i32, i32) {
    %c0_i32 = arith.constant 0 : i32
    %c0_i32_0 = arith.constant 0 : i32
    %c0_i32_1 = arith.constant 0 : i32
    return %arg0, %c0_i32, %c0_i32_0 : i32, i32, i32
  }
}

</mosaic_0001>

<llo_original>
// kernel: tpu_custom_call.1
$region0: #{tpu_custom_call.1}
  #allocation0 [shape = 'u32[]', space=smem, size = 0x4, offset = 0x4, fixed_abs, tag = 'smem constant byte address 0x4 - core index']
  #allocation1 [shape = 'u32[144,128]{1,0:T(1,128)}', space=vmem, size = 0x12000, scoped, tag = 'internal scratch']
  %s0 = inlined_call_operand.hbm [shape: f32[2,4,256], index: 0, kind: input, shape index: {}]
  %s1 = inlined_call_operand.hbm [shape: f32[2,4,4], index: 1, kind: output, shape index: {}]
  %s2 = sld [smem:[#allocation0]]
  $region49: #{tpu_custom_call.1} parent=0
    _
  %s4 = ssub.s32 1, %s2
  %s5 = scalar_select 0, %s4, %s2
  $region1: #{tpu_custom_call.1} parent=0
    #allocation2 [shape = 'u8[8192]{0}', space=vmem, size = 0x2000, scoped, tag = 'input window, operand 0']
    #allocation3 [shape = 's32[2]{0}', space=sflag, size = 0x8, scoped, tag = 'scoped memory for tpu_custom_call.1']
    #allocation4 [shape = 's32[2]{0}', space=sflag, size = 0x8, scoped, tag = 'scoped memory for tpu_custom_call.1']
    #allocation5 [shape = 'u8[4096]{0}', space=vmem, size = 0x1000, scoped, tag = 'output window, operand 0']
    %6 = vsyncpa [#allocation3], 0
    %s7 = scalar_lea.sflag [#allocation3], 1
    %8 = vsyncpa %s7, 0
    %9 = vsyncpa [#allocation4], 0
    %s10 = scalar_lea.sflag [#allocation4], 1
    %11 = vsyncpa %s10, 0
    loop: start=0, step=1, limit=4
    $region2: #{tpu_custom_call.1} parent=1 // loop_pre_header
      _
    $region3: #{tpu_custom_call.1} parent=1 // loop_header
      %s13 = sphi 0, %s17
      %p14 = scmp.ge.s32.totalorder %s13, 4
      %s20 = sphi 0, %s32
      %s21 = sphi 0, %s28
      %s22 = sphi 0, %s20
      %s23 = sphi 0, %s21
      %s24 = sphi 0, %s22
      %s25 = sphi 0, %s23
      %s37 = sphi 0, %s39
      %s40 = sphi 0, %s37
      %s41 = sphi 0, %s40
      %s57 = sphi 0, %s41
      %s63 = sphi 0, %s65
      %s66 = sphi 0, %s63
      %s67 = sphi 0, %s66
      %s83 = sphi 0, %s67
    $region4: #{tpu_custom_call.1} parent=1 // loop_header_branch
      %16 = sbr.rel (%p14) target = $region8
    $region5: #{tpu_custom_call.1} parent=1 // loop_body
      %s18 = ssub.s32 %s13, 1
      %s19 = ssub.s32 %s13, 2
      %s26 = sadd.s32 1, %s21
      %p27 = scmp.ge.s32.totalorder %s26, 1
      %s28 = scalar_select %p27, 0, %s26
      %s29 = sadd.s32 1, %s20
      %s30 = scalar_select %p27, %s29, %s20
      %p31 = scmp.ge.s32.totalorder %s30, 2
      %s32 = scalar_select %p31, 0, %s30
      %s33 = ssub.s32 %s20, %s32
      %s34 = ssub.s32 %s21, %s28
      %s35 = sor.u32 %s33, %s34
      %p36 = scmp.eq.s32.totalorder %s35, 0
      %s38 = sadd.s32 %s37, 1
      %s39 = scalar_select %p36, %s37, %s38
      %p42 = pneg %p36
      %p43 = scmp.eq.s32.totalorder %s13, 1
      %p44 = por %p42, %p43
      %p45 = scmp.ne.s32.totalorder %s37, %s40
      %p46 = scmp.eq.s32.totalorder %s13, 0
      %p47 = por %p45, %p46
      %p48 = scmp.ne.s32.totalorder %s37, %s40
      %p49 = scmp.eq.s32.totalorder %s18, 1
      %p50 = por %p48, %p49
      %p51 = scmp.ne.s32.totalorder %s40, %s41
      %p52 = scmp.eq.s32.totalorder %s18, 0
      %p53 = por %p51, %p52
      %p54 = scmp.ne.s32.totalorder %s40, %s41
      %p55 = scmp.eq.s32.totalorder %s19, 1
      %p56 = por %p54, %p55
      %p58 = scmp.ne.s32.totalorder %s41, %s57
      %p59 = scmp.eq.s32.totalorder %s19, 0
      %p60 = por %p58, %p59
      %s61 = ssub.s32 %s20, %s32
      %p62 = scmp.eq.s32.totalorder %s61, 0
      %s64 = sadd.s32 %s63, 1
      %s65 = scalar_select %p62, %s63, %s64
      %p68 = pneg %p62
      %p69 = scmp.eq.s32.totalorder %s13, 1
      %p70 = por %p68, %p69
      %p71 = scmp.ne.s32.totalorder %s63, %s66
      %p72 = scmp.eq.s32.totalorder %s13, 0
      %p73 = por %p71, %p72
      %p74 = scmp.ne.s32.totalorder %s63, %s66
      %p75 = scmp.eq.s32.totalorder %s18, 1
      %p76 = por %p74, %p75
      %p77 = scmp.ne.s32.totalorder %s66, %s67
      %p78 = scmp.eq.s32.totalorder %s18, 0
      %p79 = por %p77, %p78
      %p80 = scmp.ne.s32.totalorder %s66, %s67
      %p81 = scmp.eq.s32.totalorder %s19, 1
      %p82 = por %p80, %p81
      %p84 = scmp.ne.s32.totalorder %s67, %s83
      %p85 = scmp.eq.s32.totalorder %s19, 0
      %p86 = por %p84, %p85
      %p87 = scmp.le.s32.totalorder 1, %s13
      %p88 = scmp.lt.s32.totalorder %s13, 3
      %p89 = pnand %p87, %p88
      %p90 = pneg %p89
      // Predicated region
      $region9: #{tpu_custom_call.1} parent=5 // pred_check
        _
      $region10: #{tpu_custom_call.1} parent=5 // pred_check_branch
        %92 = sbr.rel (%p89) target = $region12
      $region11: #{tpu_custom_call.1} parent=5 // pred_region
        %s93 = ssub.s32 %s13, 1
      $region12: #{tpu_custom_call.1} parent=5 // pred_fallthru
        _
      %p94 = scmp.lt.s32.totalorder %s13, 2
      // Predicated region
      $region13: #{tpu_custom_call.1} parent=5 // pred_check
        %p95 = pneg %p94
      $region14: #{tpu_custom_call.1} parent=5 // pred_check_branch
        %97 = sbr.rel (%p95) target = $region16
      $region15: #{tpu_custom_call.1} parent=5 // pred_region
        // Predicated region
        $region17: #{tpu_custom_call.1} parent=15 // pred_check
          %p98 = pneg %p47
        $region18: #{tpu_custom_call.1} parent=15 // pred_check_branch
          %100 = sbr.rel (%p98) target = $region20
        $region19: #{tpu_custom_call.1} parent=15 // pred_region
          %s101 = sand.u32 %s37, 1
          %s102 = scalar_lea.sflag [#allocation3], %s101
          %s103 = sand.u32 %s37, 1
          %s104 = smul.addr %s103, 8
          %s105 = scalar_lea.vmem [#allocation2], %s104
          %s106 = smul.u32 2, %s21
          %s108 = ssub.s32 128, 128
          %109 = vsyncadd %s102, %s108
          %s110 = smul.addr %s20, 2
          %s111 = sadd.s32 %s106, %s110
          %s112 = smul.addr %s111, 64
          %s113 = scalar_lea.hbm %s0, %s112
          %s115 = sshll.u32 %s105, 4
          %s116 = int_to_ptr.vmem [resolvable:$true] %s115
          %118 = dma.hbm_to_vmem [thread:$0]  %s113, 128, %s116, %s102
        $region20: #{tpu_custom_call.1} parent=15 // pred_fallthru
          _
      $region16: #{tpu_custom_call.1} parent=5 // pred_fallthru
        _
      %p119 = scmp.le.s32.totalorder 1, %s13
      %p120 = scmp.lt.s32.totalorder %s13, 3
      %p121 = pnand %p119, %p120
      %p122 = pneg %p121
      // Predicated region
      $region21: #{tpu_custom_call.1} parent=5 // pred_check
        _
      $region22: #{tpu_custom_call.1} parent=5 // pred_check_branch
        %124 = sbr.rel (%p121) target = $region24
      $region23: #{tpu_custom_call.1} parent=5 // pred_region
        %s125 = ssub.s32 %s13, 1
        %s126 = sand.u32 %s40, 1
        %s127 = scalar_lea.sflag [#allocation3], %s126
        %s128 = sand.u32 %s40, 1
        %s129 = smul.addr %s128, 8
        %s130 = scalar_lea.vmem [#allocation2], %s129
        // Predicated region
        $region25: #{tpu_custom_call.1} parent=23 // pred_check
          %p131 = pneg %p53
        $region26: #{tpu_custom_call.1} parent=23 // pred_check_branch
          %133 = sbr.rel (%p131) target = $region28
        $region27: #{tpu_custom_call.1} parent=23 // pred_region
          %134 = dma.done %s127, 128
        $region28: #{tpu_custom_call.1} parent=23 // pred_fallthru
          _
        %s135 = sand.u32 %s40, 1
        %s136 = scalar_lea.sflag [#allocation3], %s135
        %s137 = sand.u32 %s40, 1
        %s138 = smul.addr %s137, 8
        %s139 = scalar_lea.vmem [#allocation2], %s138
        %p140 = pneg %p53
        %p141 = pneg %p50
        %p142 = pneg %p79
        %p143 = pneg %p76
        %s144 = sand.u32 %s66, 1
        %s145 = scalar_lea.sflag [#allocation4], %s144
        %s146 = sand.u32 %s66, 1
        %s147 = smul.addr %s146, 4
        %s148 = scalar_lea.vmem [#allocation5], %s147
        %s149 = smul.u32 2, %s23
        %p150 = scmp.eq.s32.totalorder %s23, 0
        // Predicated region
        $region29: #{tpu_custom_call.1} parent=23 // pred_check
          %p151 = pneg %p150
        $region30: #{tpu_custom_call.1} parent=23 // pred_check_branch
          %153 = sbr.rel (%p151) target = $region32
        $region31: #{tpu_custom_call.1} parent=23 // pred_region
          %vm154 = vcmask 27648
          %155 = vst.msk [vmem:[%s148] sm:$0xf] %vm154, 0.0
        $region32: #{tpu_custom_call.1} parent=23 // pred_fallthru
          _
        %v156 = vld [vmem:[%s130] sm:$0xff]
        %v157 = vld [vmem:[%s148] sm:$0xf]
        %v159 = vcombine.high %v156, %v156
        %161 = vmatprep.subr.mxu0 %v159
        %162 = vmatpush1.xpose.msra.mxu0 %v156
        %163 = vmatprep.subr.mxu0 0.0
        %164 = vmatpush1.xpose.msra.mxu0 0.0
        %165 = vmatprep.subr.mxu0 0.0
        %166 = vmatpush1.xpose.msra.mxu0 0.0
        %167 = vmatprep.subr.mxu0 0.0
        %168 = vmatpush1.xpose.msra.mxu0 0.0
        %169 = vmatprep.subr.mxu0 0.0
        %170 = vmatpush1.xpose.msra.mxu0 0.0
        %171 = vmatprep.subr.mxu0 0.0
        %172 = vmatpush1.xpose.msra.mxu0 0.0
        %173 = vmatprep.subr.mxu0 0.0
        %174 = vmatpush1.xpose.msra.mxu0 0.0
        %175 = vmatprep.subr.mxu0 0.0
        %176 = vmatpush1.xpose.msra.mxu0 0.0
        %177 = vmatprep.subr.mxu0 0.0
        %178 = vmatpush1.xpose.msra.mxu0 0.0
        %179 = vmatprep.subr.mxu0 0.0
        %180 = vmatpush1.xpose.msra.mxu0 0.0
        %181 = vmatprep.subr.mxu0 0.0
        %182 = vmatpush1.xpose.msra.mxu0 0.0
        %183 = vmatprep.subr.mxu0 0.0
        %184 = vmatpush1.xpose.msra.mxu0 0.0
        %185 = vmatprep.subr.mxu0 0.0
        %186 = vmatpush1.xpose.msra.mxu0 0.0
        %187 = vmatprep.subr.mxu0 0.0
        %188 = vmatpush1.xpose.msra.mxu0 0.0
        %189 = vmatprep.subr.mxu0 0.0
        %190 = vmatpush1.xpose.msra.mxu0 0.0
        %191 = vmatprep.subr.mxu0 0.0
        %192 = vmatpush1.xpose.msra.mxu0 0.0
        %193 = vmatprep.subr.mxu0 0.0
        %194 = vmatpush1.xpose.msra.mxu0 0.0
        %195 = vmatprep.subr.mxu0 0.0
        %196 = vmatpush1.xpose.msra.mxu0 0.0
        %197 = vmatprep.subr.mxu0 0.0
        %198 = vmatpush1.xpose.msra.mxu0 0.0
        %199 = vmatprep.subr.mxu0 0.0
        %200 = vmatpush1.xpose.msra.mxu0 0.0
        %201 = vmatprep.subr.mxu0 0.0
        %202 = vmatpush1.xpose.msra.mxu0 0.0
        %203 = vmatprep.subr.mxu0 0.0
        %204 = vmatpush1.xpose.msra.mxu0 0.0
        %205 = vmatprep.subr.mxu0 0.0
        %206 = vmatpush1.xpose.msra.mxu0 0.0
        %207 = vmatprep.subr.mxu0 0.0
        %208 = vmatpush1.xpose.msra.mxu0 0.0
        %209 = vmatprep.subr.mxu0 0.0
        %210 = vmatpush1.xpose.msra.mxu0 0.0
        %211 = vmatprep.subr.mxu0 0.0
        %212 = vmatpush1.xpose.msra.mxu0 0.0
        %213 = vmatprep.subr.mxu0 0.0
        %214 = vmatpush1.xpose.msra.mxu0 0.0
        %215 = vmatprep.subr.mxu0 0.0
        %216 = vmatpush1.xpose.msra.mxu0 0.0
        %217 = vmatprep.subr.mxu0 0.0
        %218 = vmatpush1.xpose.msra.mxu0 0.0
        %219 = vmatprep.subr.mxu0 0.0
        %220 = vmatpush1.xpose.msra.mxu0 0.0
        %221 = vmatprep.subr.mxu0 0.0
        %222 = vmatpush1.xpose.msra.mxu0 0.0
        %223 = vmatprep.subr.mxu0 0.0
        %224 = vmatpush1.xpose.msra.mxu0 0.0
        %225 = vmatprep.mubr.f32.mxu0 %v159
        %226 = vmatmul.mubr.f32.gmra.mrb[0].mxu0 %v156
        %v227 = vpop.f32.mrb[0].mxu0
        %v228 = vadd.f32 0.0, %v227
        %v229 = vpop.f32.mrb[0].mxu0
        %230 = vdwg.mxu0
        %v231 = vadd.f32 %v157, %v228
        %vm232 = vcmask 27648
        %233 = vst.msk [vmem:[%s148] sm:$0xf] %vm232, %v231
        // Predicated region
        $region33: #{tpu_custom_call.1} parent=23 // pred_check
          %p234 = pneg %p150
        $region34: #{tpu_custom_call.1} parent=23 // pred_check_branch
          %236 = sbr.rel (%p234) target = $region36
        $region35: #{tpu_custom_call.1} parent=23 // pred_region
          %v237 = vld [vmem:[%s148] sm:$0xf]
          %v238 = vsel %vm232, %v237, inf
          %239 = vmin.xlane.f32.xlu0 %v238
          %v240 = vpop.xlane.xlu0 %239
          %v241 = vsub.f32 %v240, %v237
          %v242 = vmul.f32 %v241, 1.442695
          %v243 = vpow.pop %v242
          %v244 = vsel %vm232, %v243, 0.0
          %245 = vadd.xlane.f32.xlu0 %v244
          %v246 = vpop.xlane.xlu0 %245
          %v247 = vrcp.pop %v246
          %v248 = vmul.f32 %v243, %v247
          %249 = vst.msk [vmem:[%s148] sm:$0xf] %vm232, %v248
        $region36: #{tpu_custom_call.1} parent=23 // pred_fallthru
          _
        %s250 = sand.u32 %s66, 1
        %s251 = scalar_lea.sflag [#allocation4], %s250
        %s252 = sand.u32 %s66, 1
        %s253 = smul.addr %s252, 4
        %s254 = scalar_lea.vmem [#allocation5], %s253
        // Predicated region
        $region37: #{tpu_custom_call.1} parent=23 // pred_check
          %p255 = pneg %p76
        $region38: #{tpu_custom_call.1} parent=23 // pred_check_branch
          %257 = sbr.rel (%p255) target = $region40
        $region39: #{tpu_custom_call.1} parent=23 // pred_region
          %s259 = ssub.s32 64, 64
          %260 = vsyncadd %s251, %s259
          %s261 = smul.addr %s22, 64
          %s262 = scalar_lea.hbm %s1, %s261
          %s264 = sshll.u32 %s254, 4
          %s265 = int_to_ptr.vmem [resolvable:$true] %s264
          %267 = dma.vmem_to_hbm [thread:$0]  %s265, 64, %s262, %s251
        $region40: #{tpu_custom_call.1} parent=23 // pred_fallthru
          _
      $region24: #{tpu_custom_call.1} parent=5 // pred_fallthru
        _
      %p268 = scmp.le.s32.totalorder 2, %s13
      // Predicated region
      $region41: #{tpu_custom_call.1} parent=5 // pred_check
        %p269 = pneg %p268
      $region42: #{tpu_custom_call.1} parent=5 // pred_check_branch
        %271 = sbr.rel (%p269) target = $region44
      $region43: #{tpu_custom_call.1} parent=5 // pred_region
        %s272 = ssub.s32 %s13, 2
        // Predicated region
        $region45: #{tpu_custom_call.1} parent=43 // pred_check
          %p273 = pneg %p82
        $region46: #{tpu_custom_call.1} parent=43 // pred_check_branch
          %275 = sbr.rel (%p273) target = $region48
        $region47: #{tpu_custom_call.1} parent=43 // pred_region
          %s276 = sand.u32 %s67, 1
          %s277 = scalar_lea.sflag [#allocation4], %s276
          %s278 = sand.u32 %s67, 1
          %s279 = smul.addr %s278, 4
          %s280 = scalar_lea.vmem [#allocation5], %s279
          %281 = dma.done %s277, 64
        $region48: #{tpu_custom_call.1} parent=43 // pred_fallthru
          _
      $region44: #{tpu_custom_call.1} parent=5 // pred_fallthru
        _
    $region6: #{tpu_custom_call.1} parent=1 // loop_footer
      %s17 = sadd.s32 1, %s13
    $region7: #{tpu_custom_call.1} parent=1 // loop_footer_branch
      %12 = sbr.rel target = $region3
    $region8: #{tpu_custom_call.1} parent=1 // loop_exit
      _
    %282 = vsyncpa [#allocation3], 1
    %s283 = scalar_lea.sflag [#allocation3], 1
    %284 = vsyncpa %s283, 1
    %285 = vsyncpa [#allocation4], 1
    %s286 = scalar_lea.sflag [#allocation4], 1
    %287 = vsyncpa %s286, 1

</llo_original>
